<compile_context>
chip_gen: v7x
topology: tpu7x:2x2x1
jax: 0.10.0
libtpu: 0.0.40
codegen_flags: <defaults>
</compile_context>

<pallas_src>
import jax
import jax.numpy as jnp
from jax.experimental import pallas as pl
from jax.experimental.pallas import tpu as pltpu

EMBED_SIZE = 200                      # sizes['glove']
ROWS_PER_STEP = 8                     # tokens gathered per grid step
LANE = 128
# Conservative: table may be double-buffered by the pipeline, and v7x only has
# 64 MiB VMEM per TensorCore, so keep 2 * budget well under the scoped limit.
RESIDENT_TABLE_BUDGET = 12 * 1024 * 1024
VMEM_LIMIT_BYTES = 32 * 1024 * 1024   # safe raise on v5e, == default on v6e/v7x


def _make_resident_kernel(rows):
    """Embedding table resident in VMEM; select rows with dynamic sublane slices."""
    def kernel(gid_ref, emb_ref, out_ref):
        i = pl.program_id(0)
        for k in range(rows):
            g = gid_ref[i * rows + k]                       # glove row id (SMEM)
            out_ref[pl.ds(k, 1), :] = emb_ref[pl.ds(g, 1), :]
    return kernel


def _make_gather_kernel(rows):
    """HBM row gather: the data-dependent index_maps already DMA'd the rows."""
    def kernel(gid_ref, *refs):
        del gid_ref
        out_ref = refs[-1]
        for k in range(rows):
            out_ref[pl.ds(k, 1), :] = refs[k][...]          # (1, D_pad) row
    return kernel


def glove_forward(batch, idx2glove, embeddings, *, rows_per_step=ROWS_PER_STEP,
                  force_path=None):
    """batch: (B, T) int32 word ids
       idx2glove: (W,) int32 map word_id -> glove row id
       embeddings: (V, D) float32 GloVe table
       returns (B, T, D) float32"""
    B, T = batch.shape
    V, D = embeddings.shape
    W = idx2glove.shape[0]
    n = B * T
    R = rows_per_step

    # --- word_id -> glove_id remap in the wrapper; clamp so no id can index OOB
    #     inside the kernel (Pallas does not bounds-check ref reads). ---
    flat = jnp.clip(batch.reshape(n).astype(jnp.int32), 0, W - 1)
    gids = jnp.clip(jnp.take(idx2glove.astype(jnp.int32), flat, axis=0), 0, V - 1)

    # --- lane-pad the feature dim (200 -> 256) for unmasked loads/stores. ---
    D_pad = ((D + LANE - 1) // LANE) * LANE
    emb_p = embeddings if D_pad == D else jnp.pad(
        embeddings, ((0, 0), (0, D_pad - D)))

    # --- pad token count to a multiple of R (padded ids = row 0, valid). ---
    n_pad = ((n + R - 1) // R) * R
    if n_pad != n:
        gids = jnp.pad(gids, (0, n_pad - n))
    grid = (n_pad // R,)

    out_spec = pl.BlockSpec((R, D_pad), lambda i, gid_ref: (i, 0))
    out_shape = jax.ShapeDtypeStruct((n_pad, D_pad), emb_p.dtype)
    compiler_params = pltpu.CompilerParams(
        dimension_semantics=("parallel",),
        vmem_limit_bytes=VMEM_LIMIT_BYTES)

    table_bytes = V * D_pad * emb_p.dtype.itemsize
    use_resident = table_bytes <= RESIDENT_TABLE_BUDGET
    if force_path == "resident":
        use_resident = True
    elif force_path == "gather":
        use_resident = False

    if use_resident:
        # Whole table held in VMEM (constant block index -> loaded once).
        out = pl.pallas_call(
            _make_resident_kernel(R),
            out_shape=out_shape,
            grid_spec=pltpu.PrefetchScalarGridSpec(
                num_scalar_prefetch=1,                      # gids -> SMEM
                grid=grid,
                in_specs=[pl.BlockSpec((V, D_pad), lambda i, gid_ref: (0, 0))],
                out_specs=out_spec),
            compiler_params=compiler_params,
        )(gids, emb_p)
    else:
        # HBM gather: R data-dependent (1, D_pad) row fetches per grid step,
        # each with 4-deep buffering to hide HBM latency.
        in_specs = [
            pl.BlockSpec((1, D_pad),
                         (lambda i, gid_ref, k=k: (gid_ref[i * R + k], 0)),
                         pipeline_mode=pl.Buffered(4))
            for k in range(R)
        ]
        out = pl.pallas_call(
            _make_gather_kernel(R),
            out_shape=out_shape,
            grid_spec=pltpu.PrefetchScalarGridSpec(
                num_scalar_prefetch=1,                      # gids -> SMEM
                grid=grid,
                in_specs=in_specs,
                out_specs=out_spec),
            compiler_params=compiler_params,
        )(gids, *([emb_p] * R))

    return out[:n, :D].reshape(B, T, D)


if __name__ == "__main__":
    key = jax.random.PRNGKey(0)
    k_emb, k_ids = jax.random.split(key)

    # Small synthetic shapes consistent with the module.
    GLOVE_VOCAB = 64      # rows in the pretrained GloVe table
    WORD_VOCAB = 50       # model-side vocabulary (idx2word)
    B, T = 2, 8
    D = EMBED_SIZE        # 200

    # Deterministic "pretrained" embeddings; row for '__' (row 0) zeroed out,
    # mirroring embeddings_np[self.glove_vocab['__']] = np.zeros(200).
    embeddings = jax.random.normal(k_emb, (GLOVE_VOCAB, D), dtype=jnp.float32)
    embeddings = embeddings.at[0].set(0.0)

    # Deterministic word_id -> glove_id remap table (stands in for the
    # glove_vocab dict lookup; ids past a threshold map to 'unk' = row 1).
    word_ids_range = jnp.arange(WORD_VOCAB, dtype=jnp.int32)
    idx2glove = (word_ids_range * 7 + 3) % GLOVE_VOCAB
    idx2glove = jnp.where(word_ids_range >= 40, 1, idx2glove).astype(jnp.int32)
    # TODO(synk): the original maps via a python dict of string tokens; modeled
    # here as a deterministic int32 lookup table with identical gather semantics.

    batch = jax.random.randint(k_ids, (B, T), 0, WORD_VOCAB, dtype=jnp.int32)

    # Reference (plain JAX gather).
    ref = embeddings[idx2glove[batch]]

    # Exercise both kernel paths.
    out_resident = jax.block_until_ready(
        glove_forward(batch, idx2glove, embeddings, force_path="resident"))
    out_gather = jax.block_until_ready(
        glove_forward(batch, idx2glove, embeddings, force_path="gather"))

    assert out_resident.shape == (B, T, D)
    assert out_gather.shape == (B, T, D)
    assert jnp.allclose(out_resident, ref), "resident path mismatch vs reference"
    assert jnp.allclose(out_gather, ref), "gather path mismatch vs reference"

    print("KERNEL_OK")
</pallas_src>

<mosaic_0001>
module attributes {stable_mosaic.version = 11 : i64} {
  func.func @kernel(%arg0: i32, %arg1: memref<16xi32, #tpu.memory_space<smem>>, %arg2: memref<64x256xf32, #tpu.memory_space<vmem>>, %arg3: memref<8x256xf32, #tpu.memory_space<vmem>>) attributes {dimension_semantics = [#tpu.dimension_semantics<parallel>], iteration_bounds = array<i64: 2>, scalar_prefetch = 1 : i64, scratch_operands = 0 : i64, tpu.core_type = #tpu.core_type<tc>, window_params = [{pipeline_mode = #tpu.pipeline_mode<synchronous>, transform_indices = @transform_0, window_bounds = array<i64: 64, 256>}, {transform_indices = @transform_1, window_bounds = array<i64: 8, 256>}]} {
    %c8_i32 = arith.constant 8 : i32
    %0 = arith.muli %arg0, %c8_i32 : i32
    %c0_i32 = arith.constant 0 : i32
    %1 = arith.addi %0, %c0_i32 : i32
    %2 = arith.index_cast %1 : i32 to index
    %3 = memref.load %arg1[%2] : memref<16xi32, #tpu.memory_space<smem>>
    %4 = arith.index_cast %3 : i32 to index
    %c0 = arith.constant 0 : index
    %5 = vector.load %arg2[%4, %c0] : memref<64x256xf32, #tpu.memory_space<vmem>>, vector<1x256xf32>
    %c0_0 = arith.constant 0 : index
    %c0_1 = arith.constant 0 : index
    %6 = vector.load %arg3[%c0_0, %c0_1] : memref<8x256xf32, #tpu.memory_space<vmem>>, vector<1x256xf32>
    tpu.vector_store %arg3[%c0_0, %c0_1], %5 {strides = array<i32>} : memref<8x256xf32, #tpu.memory_space<vmem>>, vector<1x256xf32>,
    %c8_i32_2 = arith.constant 8 : i32
    %7 = arith.muli %arg0, %c8_i32_2 : i32
    %c1_i32 = arith.constant 1 : i32
    %8 = arith.addi %7, %c1_i32 : i32
    %9 = arith.index_cast %8 : i32 to index
    %10 = memref.load %arg1[%9] : memref<16xi32, #tpu.memory_space<smem>>
    %11 = arith.index_cast %10 : i32 to index
    %c0_3 = arith.constant 0 : index
    %12 = vector.load %arg2[%11, %c0_3] : memref<64x256xf32, #tpu.memory_space<vmem>>, vector<1x256xf32>
    %c1 = arith.constant 1 : index
    %c0_4 = arith.constant 0 : index
    %13 = vector.load %arg3[%c1, %c0_4] : memref<8x256xf32, #tpu.memory_space<vmem>>, vector<1x256xf32>
    tpu.vector_store %arg3[%c1, %c0_4], %12 {strides = array<i32>} : memref<8x256xf32, #tpu.memory_space<vmem>>, vector<1x256xf32>,
    %c8_i32_5 = arith.constant 8 : i32
    %14 = arith.muli %arg0, %c8_i32_5 : i32
    %c2_i32 = arith.constant 2 : i32
    %15 = arith.addi %14, %c2_i32 : i32
    %16 = arith.index_cast %15 : i32 to index
    %17 = memref.load %arg1[%16] : memref<16xi32, #tpu.memory_space<smem>>
    %18 = arith.index_cast %17 : i32 to index
    %c0_6 = arith.constant 0 : index
    %19 = vector.load %arg2[%18, %c0_6] : memref<64x256xf32, #tpu.memory_space<vmem>>, vector<1x256xf32>
    %c2 = arith.constant 2 : index
    %c0_7 = arith.constant 0 : index
    %20 = vector.load %arg3[%c2, %c0_7] : memref<8x256xf32, #tpu.memory_space<vmem>>, vector<1x256xf32>
    tpu.vector_store %arg3[%c2, %c0_7], %19 {strides = array<i32>} : memref<8x256xf32, #tpu.memory_space<vmem>>, vector<1x256xf32>,
    %c8_i32_8 = arith.constant 8 : i32
    %21 = arith.muli %arg0, %c8_i32_8 : i32
    %c3_i32 = arith.constant 3 : i32
    %22 = arith.addi %21, %c3_i32 : i32
    %23 = arith.index_cast %22 : i32 to index
    %24 = memref.load %arg1[%23] : memref<16xi32, #tpu.memory_space<smem>>
    %25 = arith.index_cast %24 : i32 to index
    %c0_9 = arith.constant 0 : index
    %26 = vector.load %arg2[%25, %c0_9] : memref<64x256xf32, #tpu.memory_space<vmem>>, vector<1x256xf32>
    %c3 = arith.constant 3 : index
    %c0_10 = arith.constant 0 : index
    %27 = vector.load %arg3[%c3, %c0_10] : memref<8x256xf32, #tpu.memory_space<vmem>>, vector<1x256xf32>
    tpu.vector_store %arg3[%c3, %c0_10], %26 {strides = array<i32>} : memref<8x256xf32, #tpu.memory_space<vmem>>, vector<1x256xf32>,
    %c8_i32_11 = arith.constant 8 : i32
    %28 = arith.muli %arg0, %c8_i32_11 : i32
    %c4_i32 = arith.constant 4 : i32
    %29 = arith.addi %28, %c4_i32 : i32
    %30 = arith.index_cast %29 : i32 to index
    %31 = memref.load %arg1[%30] : memref<16xi32, #tpu.memory_space<smem>>
    %32 = arith.index_cast %31 : i32 to index
    %c0_12 = arith.constant 0 : index
    %33 = vector.load %arg2[%32, %c0_12] : memref<64x256xf32, #tpu.memory_space<vmem>>, vector<1x256xf32>
    %c4 = arith.constant 4 : index
    %c0_13 = arith.constant 0 : index
    %34 = vector.load %arg3[%c4, %c0_13] : memref<8x256xf32, #tpu.memory_space<vmem>>, vector<1x256xf32>
    tpu.vector_store %arg3[%c4, %c0_13], %33 {strides = array<i32>} : memref<8x256xf32, #tpu.memory_space<vmem>>, vector<1x256xf32>,
    %c8_i32_14 = arith.constant 8 : i32
    %35 = arith.muli %arg0, %c8_i32_14 : i32
    %c5_i32 = arith.constant 5 : i32
    %36 = arith.addi %35, %c5_i32 : i32
    %37 = arith.index_cast %36 : i32 to index
    %38 = memref.load %arg1[%37] : memref<16xi32, #tpu.memory_space<smem>>
    %39 = arith.index_cast %38 : i32 to index
    %c0_15 = arith.constant 0 : index
    %40 = vector.load %arg2[%39, %c0_15] : memref<64x256xf32, #tpu.memory_space<vmem>>, vector<1x256xf32>
    %c5 = arith.constant 5 : index
    %c0_16 = arith.constant 0 : index
    %41 = vector.load %arg3[%c5, %c0_16] : memref<8x256xf32, #tpu.memory_space<vmem>>, vector<1x256xf32>
    tpu.vector_store %arg3[%c5, %c0_16], %40 {strides = array<i32>} : memref<8x256xf32, #tpu.memory_space<vmem>>, vector<1x256xf32>,
    %c8_i32_17 = arith.constant 8 : i32
    %42 = arith.muli %arg0, %c8_i32_17 : i32
    %c6_i32 = arith.constant 6 : i32
    %43 = arith.addi %42, %c6_i32 : i32
    %44 = arith.index_cast %43 : i32 to index
    %45 = memref.load %arg1[%44] : memref<16xi32, #tpu.memory_space<smem>>
    %46 = arith.index_cast %45 : i32 to index
    %c0_18 = arith.constant 0 : index
    %47 = vector.load %arg2[%46, %c0_18] : memref<64x256xf32, #tpu.memory_space<vmem>>, vector<1x256xf32>
    %c6 = arith.constant 6 : index
    %c0_19 = arith.constant 0 : index
    %48 = vector.load %arg3[%c6, %c0_19] : memref<8x256xf32, #tpu.memory_space<vmem>>, vector<1x256xf32>
    tpu.vector_store %arg3[%c6, %c0_19], %47 {strides = array<i32>} : memref<8x256xf32, #tpu.memory_space<vmem>>, vector<1x256xf32>,
    %c8_i32_20 = arith.constant 8 : i32
    %49 = arith.muli %arg0, %c8_i32_20 : i32
    %c7_i32 = arith.constant 7 : i32
    %50 = arith.addi %49, %c7_i32 : i32
    %51 = arith.index_cast %50 : i32 to index
    %52 = memref.load %arg1[%51] : memref<16xi32, #tpu.memory_space<smem>>
    %53 = arith.index_cast %52 : i32 to index
    %c0_21 = arith.constant 0 : index
    %54 = vector.load %arg2[%53, %c0_21] : memref<64x256xf32, #tpu.memory_space<vmem>>, vector<1x256xf32>
    %c7 = arith.constant 7 : index
    %c0_22 = arith.constant 0 : index
    %55 = vector.load %arg3[%c7, %c0_22] : memref<8x256xf32, #tpu.memory_space<vmem>>, vector<1x256xf32>
    tpu.vector_store %arg3[%c7, %c0_22], %54 {strides = array<i32>} : memref<8x256xf32, #tpu.memory_space<vmem>>, vector<1x256xf32>,
    return
  }
  func.func @transform_0(%arg0: i32, %arg1: memref<16xi32, #tpu.memory_space<smem>>) -> (i32, i32) {
    %c0_i32 = arith.constant 0 : i32
    %c0_i32_0 = arith.constant 0 : i32
    %c0_i32_1 = arith.constant 0 : i32
    return %c0_i32, %c0_i32_0 : i32, i32
  }
  func.func @transform_1(%arg0: i32, %arg1: memref<16xi32, #tpu.memory_space<smem>>) -> (i32, i32) {
    %c0_i32 = arith.constant 0 : i32
    %c0_i32_0 = arith.constant 0 : i32
    return %arg0, %c0_i32 : i32, i32
  }
}

</mosaic_0001>

<llo_original>
// kernel: tpu_custom_call.1
$region0: #{tpu_custom_call.1}
  #allocation0 [shape = 'u32[]', space=smem, size = 0x4, offset = 0x4, fixed_abs, tag = 'smem constant byte address 0x4 - core index']
  #allocation1 [shape = 'u32[144,128]{1,0:T(1,128)}', space=vmem, size = 0x12000, scoped, tag = 'internal scratch']
  #allocation2 [shape = 's32[1]{0}', space=sflag, size = 0x4, scoped, tag = 'scoped memory for tpu_custom_call.1']
  #allocation3 [shape = 'u8[512]{0}', space=smem, size = 0x200, scoped, tag = 'prefetched SMEM operand 0']
  %s0 = inlined_call_operand.hbm [shape: s32[16], index: 0, kind: input, shape index: {}]
  %s1 = inlined_call_operand.hbm [shape: f32[64,256], index: 1, kind: input, shape index: {}]
  %s2 = inlined_call_operand.hbm [shape: f32[16,256], index: 2, kind: output, shape index: {}]
  %s3 = sld [smem:[#allocation0]]
  $region41: #{tpu_custom_call.1} parent=0
    _
  %s5 = ssub.s32 1, %s3
  %s6 = scalar_select 0, %s5, %s3
  %8 = dma.hbm_to_smem %s0, 16, [#allocation3], [#allocation2]
  %9 = dma.done [#allocation2], 16
  %10 = sfence
  $region1: #{tpu_custom_call.1} parent=0
    #allocation4 [shape = 'u8[65536]{0}', space=vmem, size = 0x10000, scoped, tag = 'input window, operand 1, single buffered']
    #allocation5 [shape = 's32[2]{0}', space=sflag, size = 0x8, scoped, tag = 'scoped memory for tpu_custom_call.1']
    #allocation6 [shape = 's32[2]{0}', space=sflag, size = 0x8, scoped, tag = 'scoped memory for tpu_custom_call.1']
    #allocation7 [shape = 'u8[16384]{0}', space=vmem, size = 0x4000, scoped, tag = 'output window, operand 0']
    %11 = vsyncpa [#allocation5], 0
    %12 = vsyncpa [#allocation6], 0
    %s13 = scalar_lea.sflag [#allocation6], 1
    %14 = vsyncpa %s13, 0
    loop: start=0, step=1, limit=4
    $region2: #{tpu_custom_call.1} parent=1 // loop_pre_header
      _
    $region3: #{tpu_custom_call.1} parent=1 // loop_header
      %s16 = sphi 0, %s20
      %p17 = scmp.ge.s32.totalorder %s16, 4
      %s24 = sphi 0, %s24
      %s26 = sphi 0, %s24
      %s27 = sphi 0, %s26
      %s41 = sphi 0, %s27
      %s47 = sphi 0, %s49
      %s50 = sphi 0, %s47
      %s51 = sphi 0, %s50
      %s67 = sphi 0, %s51
    $region4: #{tpu_custom_call.1} parent=1 // loop_header_branch
      %19 = sbr.rel (%p17) target = $region8
    $region5: #{tpu_custom_call.1} parent=1 // loop_body
      %s21 = ssub.s32 %s16, 1
      %s22 = ssub.s32 %s16, 2
      %s23 = sadd.s32 %s16, 1
      %s25 = sadd.s32 %s24, 1
      %p28 = scmp.eq.s32.totalorder %s16, 1
      %p29 = scmp.ne.s32.totalorder %s24, %s26
      %p30 = scmp.eq.s32.totalorder %s16, 0
      %p31 = por %p29, %p30
      %p32 = scmp.ne.s32.totalorder %s24, %s26
      %p33 = scmp.eq.s32.totalorder %s21, 1
      %p34 = por %p32, %p33
      %p35 = scmp.ne.s32.totalorder %s26, %s27
      %p36 = scmp.eq.s32.totalorder %s21, 0
      %p37 = por %p35, %p36
      %p38 = scmp.ne.s32.totalorder %s26, %s27
      %p39 = scmp.eq.s32.totalorder %s22, 1
      %p40 = por %p38, %p39
      %p42 = scmp.ne.s32.totalorder %s27, %s41
      %p43 = scmp.eq.s32.totalorder %s22, 0
      %p44 = por %p42, %p43
      %s45 = ssub.s32 %s16, %s23
      %p46 = scmp.eq.s32.totalorder %s45, 0
      %s48 = sadd.s32 %s47, 1
      %s49 = scalar_select %p46, %s47, %s48
      %p52 = pneg %p46
      %p53 = scmp.eq.s32.totalorder %s16, 1
      %p54 = por %p52, %p53
      %p55 = scmp.ne.s32.totalorder %s47, %s50
      %p56 = scmp.eq.s32.totalorder %s16, 0
      %p57 = por %p55, %p56
      %p58 = scmp.ne.s32.totalorder %s47, %s50
      %p59 = scmp.eq.s32.totalorder %s21, 1
      %p60 = por %p58, %p59
      %p61 = scmp.ne.s32.totalorder %s50, %s51
      %p62 = scmp.eq.s32.totalorder %s21, 0
      %p63 = por %p61, %p62
      %p64 = scmp.ne.s32.totalorder %s50, %s51
      %p65 = scmp.eq.s32.totalorder %s22, 1
      %p66 = por %p64, %p65
      %p68 = scmp.ne.s32.totalorder %s51, %s67
      %p69 = scmp.eq.s32.totalorder %s22, 0
      %p70 = por %p68, %p69
      %p71 = scmp.le.s32.totalorder 1, %s16
      %p72 = scmp.lt.s32.totalorder %s16, 3
      %p73 = pnand %p71, %p72
      %p74 = pneg %p73
      // Predicated region
      $region9: #{tpu_custom_call.1} parent=5 // pred_check
        _
      $region10: #{tpu_custom_call.1} parent=5 // pred_check_branch
        %76 = sbr.rel (%p73) target = $region12
      $region11: #{tpu_custom_call.1} parent=5 // pred_region
        %s77 = ssub.s32 %s16, 1
        // Predicated region
        $region13: #{tpu_custom_call.1} parent=11 // pred_check
          %p78 = pneg %p37
        $region14: #{tpu_custom_call.1} parent=11 // pred_check_branch
          %80 = sbr.rel (%p78) target = $region16
        $region15: #{tpu_custom_call.1} parent=11 // pred_region
          %s82 = ssub.s32 2048, 2048
          %83 = vsyncadd [#allocation5], %s82
          %s84 = sshll.u32 [#allocation4], 4
          %s85 = int_to_ptr.vmem [resolvable:$true] %s84
          %90 = dma.hbm_to_vmem [thread:$0]  %s1, 2048, %s85, [#allocation5], 256, 256, 16
        $region16: #{tpu_custom_call.1} parent=11 // pred_fallthru
          _
      $region12: #{tpu_custom_call.1} parent=5 // pred_fallthru
        _
      %p91 = scmp.lt.s32.totalorder %s16, 2
      // Predicated region
      $region17: #{tpu_custom_call.1} parent=5 // pred_check
        %p92 = pneg %p91
      $region18: #{tpu_custom_call.1} parent=5 // pred_check_branch
        %94 = sbr.rel (%p92) target = $region20
      $region19: #{tpu_custom_call.1} parent=5 // pred_region
        _
      $region20: #{tpu_custom_call.1} parent=5 // pred_fallthru
        _
      %p95 = scmp.le.s32.totalorder 1, %s16
      %p96 = scmp.lt.s32.totalorder %s16, 3
      %p97 = pnand %p95, %p96
      %p98 = pneg %p97
      // Predicated region
      $region21: #{tpu_custom_call.1} parent=5 // pred_check
        _
      $region22: #{tpu_custom_call.1} parent=5 // pred_check_branch
        %100 = sbr.rel (%p97) target = $region24
      $region23: #{tpu_custom_call.1} parent=5 // pred_region
        %s101 = ssub.s32 %s16, 1
        // Predicated region
        $region25: #{tpu_custom_call.1} parent=23 // pred_check
          %p102 = pneg %p37
        $region26: #{tpu_custom_call.1} parent=23 // pred_check_branch
          %104 = sbr.rel (%p102) target = $region28
        $region27: #{tpu_custom_call.1} parent=23 // pred_region
          %105 = dma.done [#allocation5], 2048
        $region28: #{tpu_custom_call.1} parent=23 // pred_fallthru
          _
        %p106 = pneg %p37
        %p107 = pneg %p34
        %p108 = pneg %p63
        %p109 = pneg %p60
        %s110 = sand.u32 %s50, 1
        %s111 = scalar_lea.sflag [#allocation6], %s110
        %s112 = sand.u32 %s50, 1
        %s113 = smul.addr %s112, 16
        %s114 = scalar_lea.vmem [#allocation7], %s113
        %s115 = smul.u32 %s21, 8
        %s116 = sld [smem:[#allocation3 + %s115]]
        %s117 = sshra.s32 %s116, 3
        %s118 = sand.u32 %s116, 7
        %s119 = sshra.s32 %s116, 3
        %s120 = sand.u32 %s116, 7
        %s121 = smul.u32 %s117, 2
        %s122 = smul.u32 %s121, 8
        %s123 = sadd.s32 %s122, %s120
        %s124 = scalar_lea.vmem [#allocation4], %s123
        %v125 = vld [vmem:[%s124] ss:$8 sm:$0x3]
        %v126 = vlaneseq
        %vm127 = vcmp.ge.s32.totalorder %v126, 0
        %vm128 = vcmp.lt.s32.totalorder %v126, 256
        %vm129 = vmand %vm127, %vm128
        %130 = vst.msk [vmem:[%s114] ss:$8 sm:$0x3] %vm129, %v125
        %131 = vst.msk [vmem:[%s114] ss:$8 sm:$0x0] %vm129, %v125
        %s132 = sadd.s32 %s115, 1
        %s133 = sld [smem:[#allocation3 + %s132]]
        %s134 = sshra.s32 %s133, 3
        %s135 = sand.u32 %s133, 7
        %s136 = sshra.s32 %s133, 3
        %s137 = sand.u32 %s133, 7
        %s138 = smul.u32 %s134, 2
        %s139 = smul.u32 %s138, 8
        %s140 = sadd.s32 %s139, %s137
        %s141 = scalar_lea.vmem [#allocation4], %s140
        %v142 = vld [vmem:[%s141] ss:$8 sm:$0x3]
        %s143 = scalar_lea.vmem %s114, 1 [#allocation7]
        %144 = vst.msk [vmem:[%s143] ss:$8 sm:$0x3] %vm129, %v142
        %145 = vst.msk [vmem:[%s143] ss:$8 sm:$0x0] %vm129, %v142
        %s146 = sadd.s32 %s115, 2
        %s147 = sld [smem:[#allocation3 + %s146]]
        %s148 = sshra.s32 %s147, 3
        %s149 = sand.u32 %s147, 7
        %s150 = sshra.s32 %s147, 3
        %s151 = sand.u32 %s147, 7
        %s152 = smul.u32 %s148, 2
        %s153 = smul.u32 %s152, 8
        %s154 = sadd.s32 %s153, %s151
        %s155 = scalar_lea.vmem [#allocation4], %s154
        %v156 = vld [vmem:[%s155] ss:$8 sm:$0x3]
        %s157 = scalar_lea.vmem %s114, 2 [#allocation7]
        %158 = vst.msk [vmem:[%s157] ss:$8 sm:$0x3] %vm129, %v156
        %159 = vst.msk [vmem:[%s157] ss:$8 sm:$0x0] %vm129, %v156
        %s160 = sadd.s32 %s115, 3
        %s161 = sld [smem:[#allocation3 + %s160]]
        %s162 = sshra.s32 %s161, 3
        %s163 = sand.u32 %s161, 7
        %s164 = sshra.s32 %s161, 3
        %s165 = sand.u32 %s161, 7
        %s166 = smul.u32 %s162, 2
        %s167 = smul.u32 %s166, 8
        %s168 = sadd.s32 %s167, %s165
        %s169 = scalar_lea.vmem [#allocation4], %s168
        %v170 = vld [vmem:[%s169] ss:$8 sm:$0x3]
        %s171 = scalar_lea.vmem %s114, 3 [#allocation7]
        %172 = vst.msk [vmem:[%s171] ss:$8 sm:$0x3] %vm129, %v170
        %173 = vst.msk [vmem:[%s171] ss:$8 sm:$0x0] %vm129, %v170
        %s174 = sadd.s32 %s115, 4
        %s175 = sld [smem:[#allocation3 + %s174]]
        %s176 = sshra.s32 %s175, 3
        %s177 = sand.u32 %s175, 7
        %s178 = sshra.s32 %s175, 3
        %s179 = sand.u32 %s175, 7
        %s180 = smul.u32 %s176, 2
        %s181 = smul.u32 %s180, 8
        %s182 = sadd.s32 %s181, %s179
        %s183 = scalar_lea.vmem [#allocation4], %s182
        %v184 = vld [vmem:[%s183] ss:$8 sm:$0x3]
        %s185 = scalar_lea.vmem %s114, 4 [#allocation7]
        %186 = vst.msk [vmem:[%s185] ss:$8 sm:$0x3] %vm129, %v184
        %187 = vst.msk [vmem:[%s185] ss:$8 sm:$0x0] %vm129, %v184
        %s188 = sadd.s32 %s115, 5
        %s189 = sld [smem:[#allocation3 + %s188]]
        %s190 = sshra.s32 %s189, 3
        %s191 = sand.u32 %s189, 7
        %s192 = sshra.s32 %s189, 3
        %s193 = sand.u32 %s189, 7
        %s194 = smul.u32 %s190, 2
        %s195 = smul.u32 %s194, 8
        %s196 = sadd.s32 %s195, %s193
        %s197 = scalar_lea.vmem [#allocation4], %s196
        %v198 = vld [vmem:[%s197] ss:$8 sm:$0x3]
        %s199 = scalar_lea.vmem %s114, 5 [#allocation7]
        %200 = vst.msk [vmem:[%s199] ss:$8 sm:$0x3] %vm129, %v198
        %201 = vst.msk [vmem:[%s199] ss:$8 sm:$0x0] %vm129, %v198
        %s202 = sadd.s32 %s115, 6
        %s203 = sld [smem:[#allocation3 + %s202]]
        %s204 = sshra.s32 %s203, 3
        %s205 = sand.u32 %s203, 7
        %s206 = sshra.s32 %s203, 3
        %s207 = sand.u32 %s203, 7
        %s208 = smul.u32 %s204, 2
        %s209 = smul.u32 %s208, 8
        %s210 = sadd.s32 %s209, %s207
        %s211 = scalar_lea.vmem [#allocation4], %s210
        %v212 = vld [vmem:[%s211] ss:$8 sm:$0x3]
        %s213 = scalar_lea.vmem %s114, 6 [#allocation7]
        %214 = vst.msk [vmem:[%s213] ss:$8 sm:$0x3] %vm129, %v212
        %215 = vst.msk [vmem:[%s213] ss:$8 sm:$0x0] %vm129, %v212
        %s216 = sadd.s32 %s115, 7
        %s217 = sld [smem:[#allocation3 + %s216]]
        %s218 = sshra.s32 %s217, 3
        %s219 = sand.u32 %s217, 7
        %s220 = sshra.s32 %s217, 3
        %s221 = sand.u32 %s217, 7
        %s222 = smul.u32 %s218, 2
        %s223 = smul.u32 %s222, 8
        %s224 = sadd.s32 %s223, %s221
        %s225 = scalar_lea.vmem [#allocation4], %s224
        %v226 = vld [vmem:[%s225] ss:$8 sm:$0x3]
        %s227 = scalar_lea.vmem %s114, 7 [#allocation7]
        %228 = vst.msk [vmem:[%s227] ss:$8 sm:$0x3] %vm129, %v226
        %229 = vst.msk [vmem:[%s227] ss:$8 sm:$0x0] %vm129, %v226
        %s230 = sand.u32 %s50, 1
        %s231 = scalar_lea.sflag [#allocation6], %s230
        %s232 = sand.u32 %s50, 1
        %s233 = smul.addr %s232, 16
        %s234 = scalar_lea.vmem [#allocation7], %s233
        // Predicated region
        $region29: #{tpu_custom_call.1} parent=23 // pred_check
          %p235 = pneg %p60
        $region30: #{tpu_custom_call.1} parent=23 // pred_check_branch
          %237 = sbr.rel (%p235) target = $region32
        $region31: #{tpu_custom_call.1} parent=23 // pred_region
          %s239 = ssub.s32 256, 256
          %240 = vsyncadd %s231, %s239
          %s241 = smul.addr %s21, 2
          %s242 = smul.addr %s241, 128
          %s243 = scalar_lea.hbm %s2, %s242
          %s245 = sshll.u32 %s234, 4
          %s246 = int_to_ptr.vmem [resolvable:$true] %s245
          %248 = dma.vmem_to_hbm [thread:$0]  %s246, 256, %s243, %s231
        $region32: #{tpu_custom_call.1} parent=23 // pred_fallthru
          _
      $region24: #{tpu_custom_call.1} parent=5 // pred_fallthru
        _
      %p249 = scmp.le.s32.totalorder 2, %s16
      // Predicated region
      $region33: #{tpu_custom_call.1} parent=5 // pred_check
        %p250 = pneg %p249
      $region34: #{tpu_custom_call.1} parent=5 // pred_check_branch
        %252 = sbr.rel (%p250) target = $region36
      $region35: #{tpu_custom_call.1} parent=5 // pred_region
        %s253 = ssub.s32 %s16, 2
        // Predicated region
        $region37: #{tpu_custom_call.1} parent=35 // pred_check
          %p254 = pneg %p66
        $region38: #{tpu_custom_call.1} parent=35 // pred_check_branch
          %256 = sbr.rel (%p254) target = $region40
        $region39: #{tpu_custom_call.1} parent=35 // pred_region
          %s257 = sand.u32 %s51, 1
          %s258 = scalar_lea.sflag [#allocation6], %s257
          %s259 = sand.u32 %s51, 1
          %s260 = smul.addr %s259, 16
          %s261 = scalar_lea.vmem [#allocation7], %s260
          %262 = dma.done %s258, 256
        $region40: #{tpu_custom_call.1} parent=35 // pred_fallthru
          _
      $region36: #{tpu_custom_call.1} parent=5 // pred_fallthru
        _
    $region6: #{tpu_custom_call.1} parent=1 // loop_footer
      %s20 = sadd.s32 1, %s16
    $region7: #{tpu_custom_call.1} parent=1 // loop_footer_branch
      %15 = sbr.rel target = $region3
    $region8: #{tpu_custom_call.1} parent=1 // loop_exit
      _
    %263 = vsyncpa [#allocation5], 1
    %s264 = scalar_lea.sflag [#allocation5], 1
    %265 = vsyncpa %s264, 1
    %266 = vsyncpa [#allocation6], 1
    %s267 = scalar_lea.sflag [#allocation6], 1
    %268 = vsyncpa %s267, 1

</llo_original>
